<compile_context>
chip_gen: v6e
topology: v6e:2x2x1
jax: 0.10.0
libtpu: 0.0.40
codegen_flags: <defaults>
</compile_context>

<pallas_src>
from functools import partial

import jax
import jax.numpy as jnp
from jax.experimental import pallas as pl
from jax.experimental.pallas import tpu as pltpu

# ----------------------- config (small, module-consistent) -----------------------
N_UNITS = 32          # NU
N_LAYERS = 2          # NL
IN_CH = 3             # coordinate dimension (WeightsField default in_ch=3)
INP_DIM = 8           # regressor input feature dim
OUT_CH = 4
POWERS = (8, 16)
LATENT = POWERS[-1]   # latent_size = powers[-1] = 16
B = 2
N_PTS = 16
MAX_TN = 512          # point tile when N_PTS scales up (multiple of 128/256)


# ----------------------------- parameter construction -----------------------------
def _linear_params(key, fan_in, fan_out):
    kw, kb = jax.random.split(key)
    scale = 1.0 / jnp.sqrt(jnp.float32(fan_in))
    w = jax.random.uniform(kw, (fan_in, fan_out), jnp.float32, -scale, scale)
    b = jax.random.uniform(kb, (1, fan_out), jnp.float32, -scale, scale)
    return w, b


def init_params(key):
    keys = jax.random.split(key, 7)
    p = {}
    # regressor = create_mlp(INP_DIM, LATENT, NU, NL=2): Lin-ReLU-Lin-ReLU-Lin
    p["rw0"], p["rb0"] = _linear_params(keys[0], INP_DIM, N_UNITS)
    p["rw1"], p["rb1"] = _linear_params(keys[1], N_UNITS, N_UNITS)
    p["rw2"], p["rb2"] = _linear_params(keys[2], N_UNITS, LATENT)
    # field: linear_x, linear_z, then create_mlp(NU, OUT_CH, NU, NL-1=1): Lin-ReLU-Lin
    p["wx"], p["bx"] = _linear_params(keys[3], IN_CH, N_UNITS)
    p["wz"], p["bz"] = _linear_params(keys[4], LATENT, N_UNITS)
    p["fw0"], p["fb0"] = _linear_params(keys[5], N_UNITS, N_UNITS)
    p["fw1"], p["fb1"] = _linear_params(keys[6], N_UNITS, OUT_CH)
    return p


def transpose_params(p):
    """One-time conversion to the transposed (channels-on-sublanes) kernel layout:
    weights -> (fan_out, fan_in), biases -> (fan_out, 1)."""
    return {k: v.T for k, v in p.items()}


# --------------------------------- fused Pallas kernel ---------------------------------
def fused_kernel(xT_ref, fT_ref, mask_ref,
                 rw0, rb0, rw1, rb1, rw2, rb2,
                 wx, bx, wz, bz, fw0, fb0, fw1, fb1,
                 o_ref, hz_ref):
    """All tensors are in transposed layout (channels on sublanes, points/batch on lanes).

    xT_ref : (IN_CH, TN)    point-coordinate tile
    fT_ref : (INP_DIM, B)   regressor features (resident)
    mask   : (LATENT, 1)    progressive latent mask (ones when inactive)
    weights: W^T (out, in); biases b^T (out, 1)
    o_ref  : (B, OUT_CH, TN) lane-dense output tile
    hz_ref : (NU, B) VMEM scratch holding linear_z(latent) (grid-invariant)
    """
    bsz = fT_ref.shape[1]
    tn = xT_ref.shape[1]

    # Grid-invariant part: regressor MLP + progressive mask + linear_z. Computed once.
    @pl.when(pl.program_id(0) == 0)
    def _():
        h = jnp.maximum(
            jnp.dot(rw0[...], fT_ref[...], preferred_element_type=jnp.float32) + rb0[...], 0.0)
        h = jnp.maximum(
            jnp.dot(rw1[...], h, preferred_element_type=jnp.float32) + rb1[...], 0.0)
        lat = jnp.dot(rw2[...], h, preferred_element_type=jnp.float32) + rb2[...]   # (LATENT, B)
        lat = lat * mask_ref[...]                                                    # mask latent rows
        hz_ref[...] = (jnp.dot(wz[...], lat, preferred_element_type=jnp.float32)
                       + bz[...])                                                    # (NU, B)

    # Per-tile field MLP with batch merged onto the lane axis: (NU, B*TN).
    hx = jnp.dot(wx[...], xT_ref[...], preferred_element_type=jnp.float32) + bx[...]  # (NU, TN)
    hz = hz_ref[...]                                                                  # (NU, B)
    h = jnp.concatenate([hx + hz[:, b:b + 1] for b in range(bsz)], axis=1)            # (NU, B*TN)
    h = jnp.maximum(h, 0.0)
    h = jnp.maximum(
        jnp.dot(fw0[...], h, preferred_element_type=jnp.float32) + fb0[...], 0.0)     # (NU, B*TN)
    o = jnp.dot(fw1[...], h, preferred_element_type=jnp.float32) + fb1[...]           # (OUT_CH, B*TN)
    for b in range(bsz):                                                              # lane-dense stores
        o_ref[b] = o[:, b * tn:(b + 1) * tn].astype(o_ref.dtype)


# ----------------------------------- wrapper -----------------------------------
def _progressive_mask(act_idx):
    if act_idx < len(POWERS):
        p_cur = POWERS[act_idx - 1] if act_idx > 0 else 0
    else:
        p_cur = LATENT
    return (jnp.arange(LATENT) < p_cur).astype(jnp.float32).reshape(LATENT, 1)


@partial(jax.jit, static_argnames=("act_idx",))
def progressive_weights_field_forward(x, features, params_t, act_idx=len(POWERS)):
    """Matches ProgressiveWeightsField.forward.
    x: (N_PTS, IN_CH), features: (B, INP_DIM), params_t: transpose_params(params).
    Default milestones=None => act_idx == n_powers => no progressive masking."""
    n_pts, in_ch = x.shape
    bsz = features.shape[0]
    n_units = params_t["wz"].shape[0]          # (NU, LATENT)
    out_ch = params_t["fw1"].shape[0]          # (OUT_CH, NU)

    tn = n_pts if n_pts <= MAX_TN else MAX_TN
    assert n_pts % tn == 0, "N_PTS must be divisible by the point tile"
    grid = (n_pts // tn,)

    xT = x.T                    # (IN_CH, N_PTS)  points on lanes
    fT = features.T             # (INP_DIM, B)
    mask = _progressive_mask(act_idx)

    consts = (params_t["rw0"], params_t["rb0"], params_t["rw1"], params_t["rb1"],
              params_t["rw2"], params_t["rb2"],
              params_t["wx"], params_t["bx"], params_t["wz"], params_t["bz"],
              params_t["fw0"], params_t["fb0"], params_t["fw1"], params_t["fb1"])

    def full(a):
        nd = a.ndim
        return pl.BlockSpec(a.shape, lambda i, _nd=nd: (0,) * _nd)   # whole-array, resident

    in_specs = ([pl.BlockSpec((in_ch, tn), lambda i: (0, i)),        # x tiled over points
                 full(fT), full(mask)]
                + [full(a) for a in consts])

    outT = pl.pallas_call(
        fused_kernel,
        out_shape=jax.ShapeDtypeStruct((bsz, out_ch, n_pts), jnp.float32),
        grid=grid,
        in_specs=in_specs,
        out_specs=pl.BlockSpec((bsz, out_ch, tn), lambda i: (0, 0, i)),
        scratch_shapes=[pltpu.VMEM((n_units, bsz), jnp.float32)],    # hz, persists across tiles
        # "arbitrary": grid is a sequential loop (program_id==0 init is well defined;
        # also avoids splitting microsecond-scale steps across v7x's two TensorCores).
        compiler_params=pltpu.CompilerParams(dimension_semantics=("arbitrary",)),
    )(xT, fT, mask, *consts)

    return jnp.transpose(outT, (0, 2, 1))      # (B, N_PTS, OUT_CH) for callers


# ------------------------------ pure-JAX reference ------------------------------
def reference_forward(x, features, p, act_idx=len(POWERS)):
    relu = lambda t: jnp.maximum(t, 0.0)
    h = relu(features @ p["rw0"] + p["rb0"])
    h = relu(h @ p["rw1"] + p["rb1"])
    latent = h @ p["rw2"] + p["rb2"]
    if act_idx < len(POWERS):
        pc = POWERS[act_idx - 1] if act_idx > 0 else 0
        latent = latent * (jnp.arange(LATENT) < pc)[None, :].astype(latent.dtype)
    hx = x @ p["wx"] + p["bx"]                       # (N, NU)
    hz = latent @ p["wz"] + p["bz"]                  # (B, NU)
    h = relu(hx[None, :, :] + hz[:, None, :])        # (B, N, NU)
    h = relu(jnp.einsum("bnc,cd->bnd", h, p["fw0"]) + p["fb0"])
    return jnp.einsum("bnc,cd->bnd", h, p["fw1"]) + p["fb1"]


# TODO(synk): step() / set_milestones() / set_cur_milestone() are host-side
# training-schedule bookkeeping (mutable Python state), not forward compute; they
# are represented here only by the static `act_idx` argument controlling the mask.

if __name__ == "__main__":
    key = jax.random.PRNGKey(0)
    kp, kx, kf = jax.random.split(key, 3)
    params = init_params(kp)
    params_t = transpose_params(params)          # one-time layout conversion
    x = jax.random.normal(kx, (N_PTS, IN_CH), jnp.float32)
    features = jax.random.normal(kf, (B, INP_DIM), jnp.float32)

    # default path (milestones=None -> all powers active -> no mask)
    out = progressive_weights_field_forward(x, features, params_t)
    out = jax.block_until_ready(out)
    ref = reference_forward(x, features, params)
    assert out.shape == (B, N_PTS, OUT_CH)
    assert jnp.allclose(out, ref, rtol=1e-2, atol=1e-3), "mismatch (default path)"

    # progressive path (act_idx=1 -> only first POWERS[0] latent channels active)
    out_m = jax.block_until_ready(
        progressive_weights_field_forward(x, features, params_t, act_idx=1))
    ref_m = reference_forward(x, features, params, act_idx=1)
    assert jnp.allclose(out_m, ref_m, rtol=1e-2, atol=1e-3), "mismatch (masked path)"

    print("KERNEL_OK")
</pallas_src>

<mosaic_0001>
module attributes {stable_mosaic.version = 11 : i64} {
  func.func @fused_kernel(%arg0: i32, %arg1: memref<3x16xf32, #tpu.memory_space<vmem>>, %arg2: memref<8x2xf32, #tpu.memory_space<vmem>>, %arg3: memref<16x1xf32, #tpu.memory_space<vmem>>, %arg4: memref<32x8xf32, #tpu.memory_space<vmem>>, %arg5: memref<32x1xf32, #tpu.memory_space<vmem>>, %arg6: memref<32x32xf32, #tpu.memory_space<vmem>>, %arg7: memref<32x1xf32, #tpu.memory_space<vmem>>, %arg8: memref<16x32xf32, #tpu.memory_space<vmem>>, %arg9: memref<16x1xf32, #tpu.memory_space<vmem>>, %arg10: memref<32x3xf32, #tpu.memory_space<vmem>>, %arg11: memref<32x1xf32, #tpu.memory_space<vmem>>, %arg12: memref<32x16xf32, #tpu.memory_space<vmem>>, %arg13: memref<32x1xf32, #tpu.memory_space<vmem>>, %arg14: memref<32x32xf32, #tpu.memory_space<vmem>>, %arg15: memref<32x1xf32, #tpu.memory_space<vmem>>, %arg16: memref<4x32xf32, #tpu.memory_space<vmem>>, %arg17: memref<4x1xf32, #tpu.memory_space<vmem>>, %arg18: memref<2x4x16xf32, #tpu.memory_space<vmem>>, %arg19: memref<32x2xf32, #tpu.memory_space<vmem>>) attributes {dimension_semantics = [#tpu.dimension_semantics<arbitrary>], iteration_bounds = array<i64: 1>, scalar_prefetch = 0 : i64, scratch_operands = 1 : i64, tpu.core_type = #tpu.core_type<tc>, window_params = [{transform_indices = @transform_0, window_bounds = array<i64: 3, 16>}, {pipeline_mode = #tpu.pipeline_mode<synchronous>, transform_indices = @transform_1, window_bounds = array<i64: 8, 2>}, {pipeline_mode = #tpu.pipeline_mode<synchronous>, transform_indices = @transform_2, window_bounds = array<i64: 16, 1>}, {pipeline_mode = #tpu.pipeline_mode<synchronous>, transform_indices = @transform_3, window_bounds = array<i64: 32, 8>}, {pipeline_mode = #tpu.pipeline_mode<synchronous>, transform_indices = @transform_4, window_bounds = array<i64: 32, 1>}, {pipeline_mode = #tpu.pipeline_mode<synchronous>, transform_indices = @transform_5, window_bounds = array<i64: 32, 32>}, {pipeline_mode = #tpu.pipeline_mode<synchronous>, transform_indices = @transform_6, window_bounds = array<i64: 32, 1>}, {pipeline_mode = #tpu.pipeline_mode<synchronous>, transform_indices = @transform_7, window_bounds = array<i64: 16, 32>}, {pipeline_mode = #tpu.pipeline_mode<synchronous>, transform_indices = @transform_8, window_bounds = array<i64: 16, 1>}, {pipeline_mode = #tpu.pipeline_mode<synchronous>, transform_indices = @transform_9, window_bounds = array<i64: 32, 3>}, {pipeline_mode = #tpu.pipeline_mode<synchronous>, transform_indices = @transform_10, window_bounds = array<i64: 32, 1>}, {pipeline_mode = #tpu.pipeline_mode<synchronous>, transform_indices = @transform_11, window_bounds = array<i64: 32, 16>}, {pipeline_mode = #tpu.pipeline_mode<synchronous>, transform_indices = @transform_12, window_bounds = array<i64: 32, 1>}, {pipeline_mode = #tpu.pipeline_mode<synchronous>, transform_indices = @transform_13, window_bounds = array<i64: 32, 32>}, {pipeline_mode = #tpu.pipeline_mode<synchronous>, transform_indices = @transform_14, window_bounds = array<i64: 32, 1>}, {pipeline_mode = #tpu.pipeline_mode<synchronous>, transform_indices = @transform_15, window_bounds = array<i64: 4, 32>}, {pipeline_mode = #tpu.pipeline_mode<synchronous>, transform_indices = @transform_16, window_bounds = array<i64: 4, 1>}, {transform_indices = @transform_17, window_bounds = array<i64: 2, 4, 16>}]} {
    %c0_i32 = arith.constant 0 : i32
    %0 = arith.cmpi eq, %arg0, %c0_i32 : i32
    %1 = arith.extui %0 : i1 to i32
    %c0_i32_0 = arith.constant 0 : i32
    %2 = arith.cmpi ne, %1, %c0_i32_0 : i32
    scf.if %2 {
      %c0_25 = arith.constant 0 : index
      %c0_26 = arith.constant 0 : index
      %39 = vector.load %arg4[%c0_25, %c0_26] : memref<32x8xf32, #tpu.memory_space<vmem>>, vector<32x8xf32>
      %c0_27 = arith.constant 0 : index
      %c0_28 = arith.constant 0 : index
      %40 = vector.load %arg2[%c0_27, %c0_28] : memref<8x2xf32, #tpu.memory_space<vmem>>, vector<8x2xf32>
      %cst_29 = arith.constant dense<0.000000e+00> : vector<32x2xf32>
      %41 = tpu.matmul %39, %40, %cst_29 {dimension_numbers = #tpu.dot_dimension_numbers<[1], [0], [0], [1], [0, 0, 1, 1], [], []>} : vector<32x8xf32>, vector<8x2xf32>, vector<32x2xf32> -> vector<32x2xf32>
      %c0_30 = arith.constant 0 : index
      %c0_31 = arith.constant 0 : index
      %42 = vector.load %arg5[%c0_30, %c0_31] : memref<32x1xf32, #tpu.memory_space<vmem>>, vector<32x1xf32>
      %43 = vector.broadcast %42 : vector<32x1xf32> to vector<32x2xf32>
      %44 = arith.addf %41, %43 : vector<32x2xf32>
      %cst_32 = arith.constant 0.000000e+00 : f32
      %45 = vector.broadcast %cst_32 : f32 to vector<32x2xf32>
      %46 = arith.maximumf %44, %45 : vector<32x2xf32>
      %c0_33 = arith.constant 0 : index
      %c0_34 = arith.constant 0 : index
      %47 = vector.load %arg6[%c0_33, %c0_34] : memref<32x32xf32, #tpu.memory_space<vmem>>, vector<32x32xf32>
      %cst_35 = arith.constant dense<0.000000e+00> : vector<32x2xf32>
      %48 = tpu.matmul %47, %46, %cst_35 {dimension_numbers = #tpu.dot_dimension_numbers<[1], [0], [0], [1], [0, 0, 1, 1], [], []>} : vector<32x32xf32>, vector<32x2xf32>, vector<32x2xf32> -> vector<32x2xf32>
      %c0_36 = arith.constant 0 : index
      %c0_37 = arith.constant 0 : index
      %49 = vector.load %arg7[%c0_36, %c0_37] : memref<32x1xf32, #tpu.memory_space<vmem>>, vector<32x1xf32>
      %50 = vector.broadcast %49 : vector<32x1xf32> to vector<32x2xf32>
      %51 = arith.addf %48, %50 : vector<32x2xf32>
      %cst_38 = arith.constant 0.000000e+00 : f32
      %52 = vector.broadcast %cst_38 : f32 to vector<32x2xf32>
      %53 = arith.maximumf %51, %52 : vector<32x2xf32>
      %c0_39 = arith.constant 0 : index
      %c0_40 = arith.constant 0 : index
      %54 = vector.load %arg8[%c0_39, %c0_40] : memref<16x32xf32, #tpu.memory_space<vmem>>, vector<16x32xf32>
      %cst_41 = arith.constant dense<0.000000e+00> : vector<16x2xf32>
      %55 = tpu.matmul %54, %53, %cst_41 {dimension_numbers = #tpu.dot_dimension_numbers<[1], [0], [0], [1], [0, 0, 1, 1], [], []>} : vector<16x32xf32>, vector<32x2xf32>, vector<16x2xf32> -> vector<16x2xf32>
      %c0_42 = arith.constant 0 : index
      %c0_43 = arith.constant 0 : index
      %56 = vector.load %arg9[%c0_42, %c0_43] : memref<16x1xf32, #tpu.memory_space<vmem>>, vector<16x1xf32>
      %57 = vector.broadcast %56 : vector<16x1xf32> to vector<16x2xf32>
      %58 = arith.addf %55, %57 : vector<16x2xf32>
      %c0_44 = arith.constant 0 : index
      %c0_45 = arith.constant 0 : index
      %59 = vector.load %arg3[%c0_44, %c0_45] : memref<16x1xf32, #tpu.memory_space<vmem>>, vector<16x1xf32>
      %60 = vector.broadcast %59 : vector<16x1xf32> to vector<16x2xf32>
      %61 = arith.mulf %58, %60 : vector<16x2xf32>
      %c0_46 = arith.constant 0 : index
      %c0_47 = arith.constant 0 : index
      %62 = vector.load %arg12[%c0_46, %c0_47] : memref<32x16xf32, #tpu.memory_space<vmem>>, vector<32x16xf32>
      %cst_48 = arith.constant dense<0.000000e+00> : vector<32x2xf32>
      %63 = tpu.matmul %62, %61, %cst_48 {dimension_numbers = #tpu.dot_dimension_numbers<[1], [0], [0], [1], [0, 0, 1, 1], [], []>} : vector<32x16xf32>, vector<16x2xf32>, vector<32x2xf32> -> vector<32x2xf32>
      %c0_49 = arith.constant 0 : index
      %c0_50 = arith.constant 0 : index
      %64 = vector.load %arg13[%c0_49, %c0_50] : memref<32x1xf32, #tpu.memory_space<vmem>>, vector<32x1xf32>
      %65 = vector.broadcast %64 : vector<32x1xf32> to vector<32x2xf32>
      %66 = arith.addf %63, %65 : vector<32x2xf32>
      %c0_51 = arith.constant 0 : index
      %c0_52 = arith.constant 0 : index
      %67 = vector.load %arg19[%c0_51, %c0_52] : memref<32x2xf32, #tpu.memory_space<vmem>>, vector<32x2xf32>
      tpu.vector_store %arg19[%c0_51, %c0_52], %66 {strides = array<i32>} : memref<32x2xf32, #tpu.memory_space<vmem>>, vector<32x2xf32>,
    } else {
    }
    %c0 = arith.constant 0 : index
    %c0_1 = arith.constant 0 : index
    %3 = vector.load %arg10[%c0, %c0_1] : memref<32x3xf32, #tpu.memory_space<vmem>>, vector<32x3xf32>
    %c0_2 = arith.constant 0 : index
    %c0_3 = arith.constant 0 : index
    %4 = vector.load %arg1[%c0_2, %c0_3] : memref<3x16xf32, #tpu.memory_space<vmem>>, vector<3x16xf32>
    %cst = arith.constant dense<0.000000e+00> : vector<32x16xf32>
    %5 = tpu.matmul %3, %4, %cst {dimension_numbers = #tpu.dot_dimension_numbers<[1], [0], [0], [1], [0, 0, 1, 1], [], []>} : vector<32x3xf32>, vector<3x16xf32>, vector<32x16xf32> -> vector<32x16xf32>
    %c0_4 = arith.constant 0 : index
    %c0_5 = arith.constant 0 : index
    %6 = vector.load %arg11[%c0_4, %c0_5] : memref<32x1xf32, #tpu.memory_space<vmem>>, vector<32x1xf32>
    %7 = vector.broadcast %6 : vector<32x1xf32> to vector<32x16xf32>
    %8 = arith.addf %5, %7 : vector<32x16xf32>
    %c0_6 = arith.constant 0 : index
    %c0_7 = arith.constant 0 : index
    %9 = vector.load %arg19[%c0_6, %c0_7] : memref<32x2xf32, #tpu.memory_space<vmem>>, vector<32x2xf32>
    %10 = vector.extract_strided_slice %9 {offsets = [0, 0], sizes = [32, 1], strides = [1, 1]} : vector<32x2xf32> to vector<32x1xf32>
    %11 = vector.broadcast %10 : vector<32x1xf32> to vector<32x16xf32>
    %12 = arith.addf %8, %11 : vector<32x16xf32>
    %13 = vector.extract_strided_slice %9 {offsets = [0, 1], sizes = [32, 1], strides = [1, 1]} : vector<32x2xf32> to vector<32x1xf32>
    %14 = vector.broadcast %13 : vector<32x1xf32> to vector<32x16xf32>
    %15 = arith.addf %8, %14 : vector<32x16xf32>
    %16 = tpu.concatenate %12, %15 in 1 : vector<32x16xf32>, vector<32x16xf32> -> vector<32x32xf32>
    %cst_8 = arith.constant 0.000000e+00 : f32
    %17 = vector.broadcast %cst_8 : f32 to vector<32x32xf32>
    %18 = arith.maximumf %16, %17 : vector<32x32xf32>
    %c0_9 = arith.constant 0 : index
    %c0_10 = arith.constant 0 : index
    %19 = vector.load %arg14[%c0_9, %c0_10] : memref<32x32xf32, #tpu.memory_space<vmem>>, vector<32x32xf32>
    %cst_11 = arith.constant dense<0.000000e+00> : vector<32x32xf32>
    %20 = tpu.matmul %19, %18, %cst_11 {dimension_numbers = #tpu.dot_dimension_numbers<[1], [0], [0], [1], [0, 0, 1, 1], [], []>} : vector<32x32xf32>, vector<32x32xf32>, vector<32x32xf32> -> vector<32x32xf32>
    %c0_12 = arith.constant 0 : index
    %c0_13 = arith.constant 0 : index
    %21 = vector.load %arg15[%c0_12, %c0_13] : memref<32x1xf32, #tpu.memory_space<vmem>>, vector<32x1xf32>
    %22 = vector.broadcast %21 : vector<32x1xf32> to vector<32x32xf32>
    %23 = arith.addf %20, %22 : vector<32x32xf32>
    %cst_14 = arith.constant 0.000000e+00 : f32
    %24 = vector.broadcast %cst_14 : f32 to vector<32x32xf32>
    %25 = arith.maximumf %23, %24 : vector<32x32xf32>
    %c0_15 = arith.constant 0 : index
    %c0_16 = arith.constant 0 : index
    %26 = vector.load %arg16[%c0_15, %c0_16] : memref<4x32xf32, #tpu.memory_space<vmem>>, vector<4x32xf32>
    %cst_17 = arith.constant dense<0.000000e+00> : vector<4x32xf32>
    %27 = tpu.matmul %26, %25, %cst_17 {dimension_numbers = #tpu.dot_dimension_numbers<[1], [0], [0], [1], [0, 0, 1, 1], [], []>} : vector<4x32xf32>, vector<32x32xf32>, vector<4x32xf32> -> vector<4x32xf32>
    %c0_18 = arith.constant 0 : index
    %c0_19 = arith.constant 0 : index
    %28 = vector.load %arg17[%c0_18, %c0_19] : memref<4x1xf32, #tpu.memory_space<vmem>>, vector<4x1xf32>
    %29 = vector.broadcast %28 : vector<4x1xf32> to vector<4x32xf32>
    %30 = arith.addf %27, %29 : vector<4x32xf32>
    %31 = vector.extract_strided_slice %30 {offsets = [0, 0], sizes = [4, 16], strides = [1, 1]} : vector<4x32xf32> to vector<4x16xf32>
    %c0_20 = arith.constant 0 : index
    %c0_21 = arith.constant 0 : index
    %c0_22 = arith.constant 0 : index
    %32 = vector.load %arg18[%c0_20, %c0_21, %c0_22] : memref<2x4x16xf32, #tpu.memory_space<vmem>>, vector<1x4x16xf32>
    %33 = vector.shape_cast %32 : vector<1x4x16xf32> to vector<4x16xf32>
    %34 = vector.shape_cast %31 : vector<4x16xf32> to vector<1x4x16xf32>
    tpu.vector_store %arg18[%c0_20, %c0_21, %c0_22], %34 {strides = array<i32>} : memref<2x4x16xf32, #tpu.memory_space<vmem>>, vector<1x4x16xf32>,
    %35 = vector.extract_strided_slice %30 {offsets = [0, 16], sizes = [4, 16], strides = [1, 1]} : vector<4x32xf32> to vector<4x16xf32>
    %c1 = arith.constant 1 : index
    %c0_23 = arith.constant 0 : index
    %c0_24 = arith.constant 0 : index
    %36 = vector.load %arg18[%c1, %c0_23, %c0_24] : memref<2x4x16xf32, #tpu.memory_space<vmem>>, vector<1x4x16xf32>
    %37 = vector.shape_cast %36 : vector<1x4x16xf32> to vector<4x16xf32>
    %38 = vector.shape_cast %35 : vector<4x16xf32> to vector<1x4x16xf32>
    tpu.vector_store %arg18[%c1, %c0_23, %c0_24], %38 {strides = array<i32>} : memref<2x4x16xf32, #tpu.memory_space<vmem>>, vector<1x4x16xf32>,
    return
  }
  func.func @transform_0(%arg0: i32) -> (i32, i32) {
    %c0_i32 = arith.constant 0 : i32
    %c0_i32_0 = arith.constant 0 : i32
    return %c0_i32, %arg0 : i32, i32
  }
  func.func @transform_1(%arg0: i32) -> (i32, i32) {
    %c0_i32 = arith.constant 0 : i32
    %c0_i32_0 = arith.constant 0 : i32
    %c0_i32_1 = arith.constant 0 : i32
    return %c0_i32, %c0_i32_0 : i32, i32
  }
  func.func @transform_2(%arg0: i32) -> (i32, i32) {
    %c0_i32 = arith.constant 0 : i32
    %c0_i32_0 = arith.constant 0 : i32
    %c0_i32_1 = arith.constant 0 : i32
    return %c0_i32, %c0_i32_0 : i32, i32
  }
  func.func @transform_3(%arg0: i32) -> (i32, i32) {
    %c0_i32 = arith.constant 0 : i32
    %c0_i32_0 = arith.constant 0 : i32
    %c0_i32_1 = arith.constant 0 : i32
    return %c0_i32, %c0_i32_0 : i32, i32
  }
  func.func @transform_4(%arg0: i32) -> (i32, i32) {
    %c0_i32 = arith.constant 0 : i32
    %c0_i32_0 = arith.constant 0 : i32
    %c0_i32_1 = arith.constant 0 : i32
    return %c0_i32, %c0_i32_0 : i32, i32
  }
  func.func @transform_5(%arg0: i32) -> (i32, i32) {
    %c0_i32 = arith.constant 0 : i32
    %c0_i32_0 = arith.constant 0 : i32
    %c0_i32_1 = arith.constant 0 : i32
    return %c0_i32, %c0_i32_0 : i32, i32
  }
  func.func @transform_6(%arg0: i32) -> (i32, i32) {
    %c0_i32 = arith.constant 0 : i32
    %c0_i32_0 = arith.constant 0 : i32
    %c0_i32_1 = arith.constant 0 : i32
    return %c0_i32, %c0_i32_0 : i32, i32
  }
  func.func @transform_7(%arg0: i32) -> (i32, i32) {
    %c0_i32 = arith.constant 0 : i32
    %c0_i32_0 = arith.constant 0 : i32
    %c0_i32_1 = arith.constant 0 : i32
    return %c0_i32, %c0_i32_0 : i32, i32
  }
  func.func @transform_8(%arg0: i32) -> (i32, i32) {
    %c0_i32 = arith.constant 0 : i32
    %c0_i32_0 = arith.constant 0 : i32
    %c0_i32_1 = arith.constant 0 : i32
    return %c0_i32, %c0_i32_0 : i32, i32
  }
  func.func @transform_9(%arg0: i32) -> (i32, i32) {
    %c0_i32 = arith.constant 0 : i32
    %c0_i32_0 = arith.constant 0 : i32
    %c0_i32_1 = arith.constant 0 : i32
    return %c0_i32, %c0_i32_0 : i32, i32
  }
  func.func @transform_10(%arg0: i32) -> (i32, i32) {
    %c0_i32 = arith.constant 0 : i32
    %c0_i32_0 = arith.constant 0 : i32
    %c0_i32_1 = arith.constant 0 : i32
    return %c0_i32, %c0_i32_0 : i32, i32
  }
  func.func @transform_11(%arg0: i32) -> (i32, i32) {
    %c0_i32 = arith.constant 0 : i32
    %c0_i32_0 = arith.constant 0 : i32
    %c0_i32_1 = arith.constant 0 : i32
    return %c0_i32, %c0_i32_0 : i32, i32
  }
  func.func @transform_12(%arg0: i32) -> (i32, i32) {
    %c0_i32 = arith.constant 0 : i32
    %c0_i32_0 = arith.constant 0 : i32
    %c0_i32_1 = arith.constant 0 : i32
    return %c0_i32, %c0_i32_0 : i32, i32
  }
  func.func @transform_13(%arg0: i32) -> (i32, i32) {
    %c0_i32 = arith.constant 0 : i32
    %c0_i32_0 = arith.constant 0 : i32
    %c0_i32_1 = arith.constant 0 : i32
    return %c0_i32, %c0_i32_0 : i32, i32
  }
  func.func @transform_14(%arg0: i32) -> (i32, i32) {
    %c0_i32 = arith.constant 0 : i32
    %c0_i32_0 = arith.constant 0 : i32
    %c0_i32_1 = arith.constant 0 : i32
    return %c0_i32, %c0_i32_0 : i32, i32
  }
  func.func @transform_15(%arg0: i32) -> (i32, i32) {
    %c0_i32 = arith.constant 0 : i32
    %c0_i32_0 = arith.constant 0 : i32
    %c0_i32_1 = arith.constant 0 : i32
    return %c0_i32, %c0_i32_0 : i32, i32
  }
  func.func @transform_16(%arg0: i32) -> (i32, i32) {
    %c0_i32 = arith.constant 0 : i32
    %c0_i32_0 = arith.constant 0 : i32
    %c0_i32_1 = arith.constant 0 : i32
    return %c0_i32, %c0_i32_0 : i32, i32
  }
  func.func @transform_17(%arg0: i32) -> (i32, i32, i32) {
    %c0_i32 = arith.constant 0 : i32
    %c0_i32_0 = arith.constant 0 : i32
    %c0_i32_1 = arith.constant 0 : i32
    return %c0_i32, %c0_i32_0, %arg0 : i32, i32, i32
  }
}

</mosaic_0001>

<llo_original>
// kernel: progressive_weights_field_forward.1
$region0: #{progressive_weights_field_forward.1}
  #allocation0 [shape = 'u32[]', space=smem, size = 0x4, offset = 0x4, fixed_abs, tag = 'smem constant byte address 0x4 - core index']
  #allocation1 [shape = 'u32[144,128]{1,0:T(1,128)}', space=vmem, size = 0x12000, scoped, tag = 'internal scratch']
  #allocation2 [shape = 'f32[32,2]{1,0:T(8,128)}', space=vmem, size = 0x4000, scoped, tag = 'scratch operand']
  %s0 = inlined_call_operand.vmem [shape: f32[3,16], index: 0, kind: input, shape index: {}]
  %s1 = inlined_call_operand.vmem [shape: f32[8,2], index: 1, kind: input, shape index: {}]
  %s2 = inlined_call_operand.vmem [shape: f32[16,1], index: 2, kind: input, shape index: {}]
  %s3 = inlined_call_operand.vmem [shape: f32[32,8], index: 3, kind: input, shape index: {}]
  %s4 = inlined_call_operand.vmem [shape: f32[32,1], index: 4, kind: input, shape index: {}]
  %s5 = inlined_call_operand.vmem [shape: f32[32,32], index: 5, kind: input, shape index: {}]
  %s6 = inlined_call_operand.vmem [shape: f32[32,1], index: 6, kind: input, shape index: {}]
  %s7 = inlined_call_operand.vmem [shape: f32[16,32], index: 7, kind: input, shape index: {}]
  %s8 = inlined_call_operand.vmem [shape: f32[16,1], index: 8, kind: input, shape index: {}]
  %s9 = inlined_call_operand.vmem [shape: f32[32,3], index: 9, kind: input, shape index: {}]
  %s10 = inlined_call_operand.vmem [shape: f32[32,1], index: 10, kind: input, shape index: {}]
  %s11 = inlined_call_operand.vmem [shape: f32[32,16], index: 11, kind: input, shape index: {}]
  %s12 = inlined_call_operand.vmem [shape: f32[32,1], index: 12, kind: input, shape index: {}]
  %s13 = inlined_call_operand.vmem [shape: f32[32,32], index: 13, kind: input, shape index: {}]
  %s14 = inlined_call_operand.vmem [shape: f32[32,1], index: 14, kind: input, shape index: {}]
  %s15 = inlined_call_operand.vmem [shape: f32[4,32], index: 15, kind: input, shape index: {}]
  %s16 = inlined_call_operand.vmem [shape: f32[4,1], index: 16, kind: input, shape index: {}]
  %s17 = inlined_call_operand.hbm [shape: f32[2,4,16], index: 17, kind: output, shape index: {}]
  %s18 = sld [smem:[#allocation0]]
  $region82: #{progressive_weights_field_forward.1} parent=0
    _
  %s20 = ssub.s32 1, %s18
  %s21 = scalar_select 0, %s20, %s18
  $region1: #{progressive_weights_field_forward.1} parent=0
    #allocation3 [shape = 'u8[4096]{0}', space=vmem, size = 0x1000, scoped, tag = 'output window, operand 0, single buffered']
    #allocation4 [shape = 's32[1]{0}', space=sflag, size = 0x4, scoped, tag = 'scoped memory for progressive_weights_field_forward.1']
    %22 = vsyncpa [#allocation4], 0
    // Predicated region
    $region2: #{progressive_weights_field_forward.1} parent=1 // pred_check
      _
    $region3: #{progressive_weights_field_forward.1} parent=1 // pred_check_branch
      %24 = sbr.rel (0) target = $region5
    $region4: #{progressive_weights_field_forward.1} parent=1 // pred_region
      _
    $region5: #{progressive_weights_field_forward.1} parent=1 // pred_fallthru
      _
    // Predicated region
    $region6: #{progressive_weights_field_forward.1} parent=1 // pred_check
      _
    $region7: #{progressive_weights_field_forward.1} parent=1 // pred_check_branch
      %26 = sbr.rel (0) target = $region9
    $region8: #{progressive_weights_field_forward.1} parent=1 // pred_region
      _
    $region9: #{progressive_weights_field_forward.1} parent=1 // pred_fallthru
      _
    // Predicated region
    $region10: #{progressive_weights_field_forward.1} parent=1 // pred_check
      _
    $region11: #{progressive_weights_field_forward.1} parent=1 // pred_check_branch
      %28 = sbr.rel (0) target = $region13
    $region12: #{progressive_weights_field_forward.1} parent=1 // pred_region
      _
    $region13: #{progressive_weights_field_forward.1} parent=1 // pred_fallthru
      _
    // Predicated region
    $region14: #{progressive_weights_field_forward.1} parent=1 // pred_check
      _
    $region15: #{progressive_weights_field_forward.1} parent=1 // pred_check_branch
      %30 = sbr.rel (0) target = $region17
    $region16: #{progressive_weights_field_forward.1} parent=1 // pred_region
      _
    $region17: #{progressive_weights_field_forward.1} parent=1 // pred_fallthru
      _
    // Predicated region
    $region18: #{progressive_weights_field_forward.1} parent=1 // pred_check
      _
    $region19: #{progressive_weights_field_forward.1} parent=1 // pred_check_branch
      %32 = sbr.rel (0) target = $region21
    $region20: #{progressive_weights_field_forward.1} parent=1 // pred_region
      _
    $region21: #{progressive_weights_field_forward.1} parent=1 // pred_fallthru
      _
    // Predicated region
    $region22: #{progressive_weights_field_forward.1} parent=1 // pred_check
      _
    $region23: #{progressive_weights_field_forward.1} parent=1 // pred_check_branch
      %34 = sbr.rel (0) target = $region25
    $region24: #{progressive_weights_field_forward.1} parent=1 // pred_region
      _
    $region25: #{progressive_weights_field_forward.1} parent=1 // pred_fallthru
      _
    // Predicated region
    $region26: #{progressive_weights_field_forward.1} parent=1 // pred_check
      _
    $region27: #{progressive_weights_field_forward.1} parent=1 // pred_check_branch
      %36 = sbr.rel (0) target = $region29
    $region28: #{progressive_weights_field_forward.1} parent=1 // pred_region
      _
    $region29: #{progressive_weights_field_forward.1} parent=1 // pred_fallthru
      _
    // Predicated region
    $region30: #{progressive_weights_field_forward.1} parent=1 // pred_check
      _
    $region31: #{progressive_weights_field_forward.1} parent=1 // pred_check_branch
      %38 = sbr.rel (0) target = $region33
    $region32: #{progressive_weights_field_forward.1} parent=1 // pred_region
      _
    $region33: #{progressive_weights_field_forward.1} parent=1 // pred_fallthru
      _
    // Predicated region
    $region34: #{progressive_weights_field_forward.1} parent=1 // pred_check
      _
    $region35: #{progressive_weights_field_forward.1} parent=1 // pred_check_branch
      %40 = sbr.rel (0) target = $region37
    $region36: #{progressive_weights_field_forward.1} parent=1 // pred_region
      _
    $region37: #{progressive_weights_field_forward.1} parent=1 // pred_fallthru
      _
    // Predicated region
    $region38: #{progressive_weights_field_forward.1} parent=1 // pred_check
      _
    $region39: #{progressive_weights_field_forward.1} parent=1 // pred_check_branch
      %42 = sbr.rel (0) target = $region41
    $region40: #{progressive_weights_field_forward.1} parent=1 // pred_region
      _
    $region41: #{progressive_weights_field_forward.1} parent=1 // pred_fallthru
      _
    // Predicated region
    $region42: #{progressive_weights_field_forward.1} parent=1 // pred_check
      _
    $region43: #{progressive_weights_field_forward.1} parent=1 // pred_check_branch
      %44 = sbr.rel (0) target = $region45
    $region44: #{progressive_weights_field_forward.1} parent=1 // pred_region
      _
    $region45: #{progressive_weights_field_forward.1} parent=1 // pred_fallthru
      _
    // Predicated region
    $region46: #{progressive_weights_field_forward.1} parent=1 // pred_check
      _
    $region47: #{progressive_weights_field_forward.1} parent=1 // pred_check_branch
      %46 = sbr.rel (0) target = $region49
    $region48: #{progressive_weights_field_forward.1} parent=1 // pred_region
      _
    $region49: #{progressive_weights_field_forward.1} parent=1 // pred_fallthru
      _
    // Predicated region
    $region50: #{progressive_weights_field_forward.1} parent=1 // pred_check
      _
    $region51: #{progressive_weights_field_forward.1} parent=1 // pred_check_branch
      %48 = sbr.rel (0) target = $region53
    $region52: #{progressive_weights_field_forward.1} parent=1 // pred_region
      _
    $region53: #{progressive_weights_field_forward.1} parent=1 // pred_fallthru
      _
    // Predicated region
    $region54: #{progressive_weights_field_forward.1} parent=1 // pred_check
      _
    $region55: #{progressive_weights_field_forward.1} parent=1 // pred_check_branch
      %50 = sbr.rel (0) target = $region57
    $region56: #{progressive_weights_field_forward.1} parent=1 // pred_region
      _
    $region57: #{progressive_weights_field_forward.1} parent=1 // pred_fallthru
      _
    // Predicated region
    $region58: #{progressive_weights_field_forward.1} parent=1 // pred_check
      _
    $region59: #{progressive_weights_field_forward.1} parent=1 // pred_check_branch
      %52 = sbr.rel (0) target = $region61
    $region60: #{progressive_weights_field_forward.1} parent=1 // pred_region
      _
    $region61: #{progressive_weights_field_forward.1} parent=1 // pred_fallthru
      _
    // Predicated region
    $region62: #{progressive_weights_field_forward.1} parent=1 // pred_check
      _
    $region63: #{progressive_weights_field_forward.1} parent=1 // pred_check_branch
      %54 = sbr.rel (0) target = $region65
    $region64: #{progressive_weights_field_forward.1} parent=1 // pred_region
      _
    $region65: #{progressive_weights_field_forward.1} parent=1 // pred_fallthru
      _
    // Predicated region
    $region66: #{progressive_weights_field_forward.1} parent=1 // pred_check
      _
    $region67: #{progressive_weights_field_forward.1} parent=1 // pred_check_branch
      %56 = sbr.rel (0) target = $region69
    $region68: #{progressive_weights_field_forward.1} parent=1 // pred_region
      _
    $region69: #{progressive_weights_field_forward.1} parent=1 // pred_fallthru
      _
    %p57 = scmp.eq.s32.totalorder 0, 0
    // Predicated region
    $region70: #{progressive_weights_field_forward.1} parent=1 // pred_check
      %p58 = pneg %p57
    $region71: #{progressive_weights_field_forward.1} parent=1 // pred_check_branch
      %60 = sbr.rel (%p58) target = $region73
    $region72: #{progressive_weights_field_forward.1} parent=1 // pred_region
      %v61 = vld [vmem:[%s3] sm:$0xff]
      %v62 = vld [vmem:[%s3 + $0x8] sm:$0xff]
      %v63 = vld [vmem:[%s3 + $0x10] sm:$0xff]
      %v64 = vld [vmem:[%s3 + $0x18] sm:$0xff]
      %v65 = vld [vmem:[%s1] sm:$0xff]
      %v66 = vld [vmem:[%s4] sm:$0xff]
      %v67 = vld [vmem:[%s4 + $0x8] sm:$0xff]
      %v68 = vld [vmem:[%s4 + $0x10] sm:$0xff]
      %v69 = vld [vmem:[%s4 + $0x18] sm:$0xff]
      %71 = vset.pattern.permute.xlu0 0
      %72 = vperm.xlu0 %71, %v66
      %v73 = vpop.permute.xlu0 %72
      %76 = vset.pattern.permute.xlu0 0
      %77 = vperm.xlu0 %76, %v67
      %v78 = vpop.permute.xlu0 %77
      %81 = vset.pattern.permute.xlu0 0
      %82 = vperm.xlu0 %81, %v68
      %v83 = vpop.permute.xlu0 %82
      %86 = vset.pattern.permute.xlu0 0
      %87 = vperm.xlu0 %86, %v69
      %v88 = vpop.permute.xlu0 %87
      %vm90 = vcmask 64512
      %v92 = vsel %vm90, %v61, 0
      %v95 = vsel %vm90, %v62, 0
      %v98 = vsel %vm90, %v63, 0
      %v101 = vsel %vm90, %v64, 0
      %103 = vmatprep.subr.mxu0 0.0
      %104 = vmatpush1.msra.mxu0 0.0
      %105 = vmatprep.subr.mxu0 0.0
      %106 = vmatpush1.msra.mxu0 0.0
      %107 = vmatprep.subr.mxu0 0.0
      %108 = vmatpush1.msra.mxu0 0.0
      %109 = vmatprep.subr.mxu0 0.0
      %110 = vmatpush1.msra.mxu0 0.0
      %111 = vmatprep.subr.mxu0 0.0
      %112 = vmatpush1.msra.mxu0 0.0
      %113 = vmatprep.subr.mxu0 0.0
      %114 = vmatpush1.msra.mxu0 0.0
      %115 = vmatprep.subr.mxu0 0.0
      %116 = vmatpush1.msra.mxu0 0.0
      %117 = vmatprep.subr.mxu0 0.0
      %118 = vmatpush1.msra.mxu0 0.0
      %119 = vmatprep.subr.mxu0 0.0
      %120 = vmatpush1.msra.mxu0 0.0
      %121 = vmatprep.subr.mxu0 0.0
      %122 = vmatpush1.msra.mxu0 0.0
      %123 = vmatprep.subr.mxu0 0.0
      %124 = vmatpush1.msra.mxu0 0.0
      %125 = vmatprep.subr.mxu0 0.0
      %126 = vmatpush1.msra.mxu0 0.0
      %127 = vmatprep.subr.mxu0 0.0
      %128 = vmatpush1.msra.mxu0 0.0
      %129 = vmatprep.subr.mxu0 0.0
      %130 = vmatpush1.msra.mxu0 0.0
      %131 = vmatprep.subr.mxu0 0.0
      %132 = vmatpush1.msra.mxu0 0.0
      %133 = vmatprep.subr.mxu0 0.0
      %134 = vmatpush1.msra.mxu0 %v65
      %135 = vmatprep.subr.mxu0 0.0
      %136 = vmatpush2.msra.mxu0 0.0
      %137 = vmatprep.subr.mxu0 0.0
      %138 = vmatpush2.msra.mxu0 0.0
      %139 = vmatprep.subr.mxu0 0.0
      %140 = vmatpush2.msra.mxu0 0.0
      %141 = vmatprep.subr.mxu0 0.0
      %142 = vmatpush2.msra.mxu0 0.0
      %143 = vmatprep.subr.mxu0 0.0
      %144 = vmatpush2.msra.mxu0 0.0
      %145 = vmatprep.subr.mxu0 0.0
      %146 = vmatpush2.msra.mxu0 0.0
      %147 = vmatprep.subr.mxu0 0.0
      %148 = vmatpush2.msra.mxu0 0.0
      %149 = vmatprep.subr.mxu0 0.0
      %150 = vmatpush2.msra.mxu0 0.0
      %151 = vmatprep.subr.mxu0 0.0
      %152 = vmatpush2.msra.mxu0 0.0
      %153 = vmatprep.subr.mxu0 0.0
      %154 = vmatpush2.msra.mxu0 0.0
      %155 = vmatprep.subr.mxu0 0.0
      %156 = vmatpush2.msra.mxu0 0.0
      %157 = vmatprep.subr.mxu0 0.0
      %158 = vmatpush2.msra.mxu0 0.0
      %159 = vmatprep.subr.mxu0 0.0
      %160 = vmatpush2.msra.mxu0 0.0
      %161 = vmatprep.subr.mxu0 0.0
      %162 = vmatpush2.msra.mxu0 0.0
      %163 = vmatprep.subr.mxu0 0.0
      %164 = vmatpush2.msra.mxu0 0.0
      %165 = vmatprep.subr.mxu0 0.0
      %166 = vmatpush2.msra.mxu0 0.0
      %167 = vmatprep.mubr.f32.mxu0 0.0
      %168 = vmatmul.mubr.f32.gmra.mxu0 %v92
      %v169 = vpop.f32.mrf.mxu0
      %v170 = vadd.f32 %v73, %v169
      %v171 = vpop.f32.mrf.mxu0
      %172 = vmatprep.mubr.f32.mxu0 0.0
      %173 = vmatmul.mubr.f32.gmra.mxu0 %v95
      %v174 = vpop.f32.mrf.mxu0
      %v175 = vadd.f32 %v78, %v174
      %v176 = vpop.f32.mrf.mxu0
      %177 = vmatprep.mubr.f32.mxu0 0.0
      %178 = vmatmul.mubr.f32.gmra.mxu0 %v98
      %v179 = vpop.f32.mrf.mxu0
      %v180 = vadd.f32 %v83, %v179
      %v181 = vpop.f32.mrf.mxu0
      %182 = vmatprep.mubr.f32.mxu0 0.0
      %183 = vmatmul.mubr.f32.gmra.mxu0 %v101
      %v184 = vpop.f32.mrf.mxu0
      %v185 = vadd.f32 %v88, %v184
      %v186 = vpop.f32.mrf.mxu0
      %187 = vdwg.mxu0
      %v188 = vmax.f32 %v170, 0.0
      %v189 = vmax.f32 %v175, 0.0
      %v190 = vmax.f32 %v180, 0.0
      %v191 = vmax.f32 %v185, 0.0
      %v192 = vld [vmem:[%s5] sm:$0xff]
      %v193 = vld [vmem:[%s5 + $0x8] sm:$0xff]
      %v194 = vld [vmem:[%s5 + $0x10] sm:$0xff]
      %v195 = vld [vmem:[%s5 + $0x18] sm:$0xff]
      %v196 = vld [vmem:[%s6] sm:$0xff]
      %v197 = vld [vmem:[%s6 + $0x8] sm:$0xff]
      %v198 = vld [vmem:[%s6 + $0x10] sm:$0xff]
      %v199 = vld [vmem:[%s6 + $0x18] sm:$0xff]
      %201 = vset.pattern.permute.xlu0 0
      %202 = vperm.xlu0 %201, %v196
      %v203 = vpop.permute.xlu0 %202
      %206 = vset.pattern.permute.xlu0 0
      %207 = vperm.xlu0 %206, %v197
      %v208 = vpop.permute.xlu0 %207
      %211 = vset.pattern.permute.xlu0 0
      %212 = vperm.xlu0 %211, %v198
      %v213 = vpop.permute.xlu0 %212
      %216 = vset.pattern.permute.xlu0 0
      %217 = vperm.xlu0 %216, %v199
      %v218 = vpop.permute.xlu0 %217
      %vm220 = vcmask 261120
      %v222 = vsel %vm220, %v192, 0
      %v225 = vsel %vm220, %v193, 0
      %v228 = vsel %vm220, %v194, 0
      %v231 = vsel %vm220, %v195, 0
      %233 = vmatprep.subr.mxu0 0.0
      %234 = vmatpush1.msra.mxu0 0.0
      %235 = vmatprep.subr.mxu0 0.0
      %236 = vmatpush1.msra.mxu0 0.0
      %237 = vmatprep.subr.mxu0 0.0
      %238 = vmatpush1.msra.mxu0 0.0
      %239 = vmatprep.subr.mxu0 0.0
      %240 = vmatpush1.msra.mxu0 0.0
      %241 = vmatprep.subr.mxu0 0.0
      %242 = vmatpush1.msra.mxu0 0.0
      %243 = vmatprep.subr.mxu0 0.0
      %244 = vmatpush1.msra.mxu0 0.0
      %245 = vmatprep.subr.mxu0 0.0
      %246 = vmatpush1.msra.mxu0 0.0
      %247 = vmatprep.subr.mxu0 0.0
      %248 = vmatpush1.msra.mxu0 0.0
      %249 = vmatprep.subr.mxu0 0.0
      %250 = vmatpush1.msra.mxu0 0.0
      %251 = vmatprep.subr.mxu0 0.0
      %252 = vmatpush1.msra.mxu0 0.0
      %253 = vmatprep.subr.mxu0 0.0
      %254 = vmatpush1.msra.mxu0 0.0
      %255 = vmatprep.subr.mxu0 0.0
      %256 = vmatpush1.msra.mxu0 0.0
      %257 = vmatprep.subr.mxu0 0.0
      %258 = vmatpush1.msra.mxu0 %v191
      %259 = vmatprep.subr.mxu0 0.0
      %260 = vmatpush1.msra.mxu0 %v190
      %261 = vmatprep.subr.mxu0 0.0
      %262 = vmatpush1.msra.mxu0 %v189
      %263 = vmatprep.subr.mxu0 0.0
      %264 = vmatpush1.msra.mxu0 %v188
      %265 = vmatprep.subr.mxu0 0.0
      %266 = vmatpush2.msra.mxu0 0.0
      %267 = vmatprep.subr.mxu0 0.0
      %268 = vmatpush2.msra.mxu0 0.0
      %269 = vmatprep.subr.mxu0 0.0
      %270 = vmatpush2.msra.mxu0 0.0
      %271 = vmatprep.subr.mxu0 0.0
      %272 = vmatpush2.msra.mxu0 0.0
      %273 = vmatprep.subr.mxu0 0.0
      %274 = vmatpush2.msra.mxu0 0.0
      %275 = vmatprep.subr.mxu0 0.0
      %276 = vmatpush2.msra.mxu0 0.0
      %277 = vmatprep.subr.mxu0 0.0
      %278 = vmatpush2.msra.mxu0 0.0
      %279 = vmatprep.subr.mxu0 0.0
      %280 = vmatpush2.msra.mxu0 0.0
      %281 = vmatprep.subr.mxu0 0.0
      %282 = vmatpush2.msra.mxu0 0.0
      %283 = vmatprep.subr.mxu0 0.0
      %284 = vmatpush2.msra.mxu0 0.0
      %285 = vmatprep.subr.mxu0 0.0
      %286 = vmatpush2.msra.mxu0 0.0
      %287 = vmatprep.subr.mxu0 0.0
      %288 = vmatpush2.msra.mxu0 0.0
      %289 = vmatprep.subr.mxu0 0.0
      %290 = vmatpush2.msra.mxu0 0.0
      %291 = vmatprep.subr.mxu0 0.0
      %292 = vmatpush2.msra.mxu0 0.0
      %293 = vmatprep.subr.mxu0 0.0
      %294 = vmatpush2.msra.mxu0 0.0
      %295 = vmatprep.subr.mxu0 0.0
      %296 = vmatpush2.msra.mxu0 0.0
      %297 = vmatprep.mubr.f32.mxu0 0.0
      %298 = vmatmul.mubr.f32.gmra.mxu0 %v222
      %v299 = vpop.f32.mrf.mxu0
      %v300 = vadd.f32 %v203, %v299
      %v301 = vpop.f32.mrf.mxu0
      %302 = vmatprep.mubr.f32.mxu0 0.0
      %303 = vmatmul.mubr.f32.gmra.mxu0 %v225
      %v304 = vpop.f32.mrf.mxu0
      %v305 = vadd.f32 %v208, %v304
      %v306 = vpop.f32.mrf.mxu0
      %307 = vmatprep.mubr.f32.mxu0 0.0
      %308 = vmatmul.mubr.f32.gmra.mxu0 %v228
      %v309 = vpop.f32.mrf.mxu0
      %v310 = vadd.f32 %v213, %v309
      %v311 = vpop.f32.mrf.mxu0
      %312 = vmatprep.mubr.f32.mxu0 0.0
      %313 = vmatmul.mubr.f32.gmra.mxu0 %v231
      %v314 = vpop.f32.mrf.mxu0
      %v315 = vadd.f32 %v218, %v314
      %v316 = vpop.f32.mrf.mxu0
      %317 = vdwg.mxu0
      %v318 = vmax.f32 %v300, 0.0
      %v319 = vmax.f32 %v305, 0.0
      %v320 = vmax.f32 %v310, 0.0
      %v321 = vmax.f32 %v315, 0.0
      %v322 = vld [vmem:[%s7] sm:$0xff]
      %v323 = vld [vmem:[%s7 + $0x8] sm:$0xff]
      %v324 = vld [vmem:[%s8] sm:$0xff]
      %v325 = vld [vmem:[%s8 + $0x8] sm:$0xff]
      %327 = vset.pattern.permute.xlu0 0
      %328 = vperm.xlu0 %327, %v324
      %v329 = vpop.permute.xlu0 %328
      %332 = vset.pattern.permute.xlu0 0
      %333 = vperm.xlu0 %332, %v325
      %v334 = vpop.permute.xlu0 %333
      %v337 = vsel %vm220, %v322, 0
      %v340 = vsel %vm220, %v323, 0
      %342 = vmatprep.subr.mxu0 0.0
      %343 = vmatpush1.msra.mxu0 0.0
      %344 = vmatprep.subr.mxu0 0.0
      %345 = vmatpush1.msra.mxu0 0.0
      %346 = vmatprep.subr.mxu0 0.0
      %347 = vmatpush1.msra.mxu0 0.0
      %348 = vmatprep.subr.mxu0 0.0
      %349 = vmatpush1.msra.mxu0 0.0
      %350 = vmatprep.subr.mxu0 0.0
      %351 = vmatpush1.msra.mxu0 0.0
      %352 = vmatprep.subr.mxu0 0.0
      %353 = vmatpush1.msra.mxu0 0.0
      %354 = vmatprep.subr.mxu0 0.0
      %355 = vmatpush1.msra.mxu0 0.0
      %356 = vmatprep.subr.mxu0 0.0
      %357 = vmatpush1.msra.mxu0 0.0
      %358 = vmatprep.subr.mxu0 0.0
      %359 = vmatpush1.msra.mxu0 0.0
      %360 = vmatprep.subr.mxu0 0.0
      %361 = vmatpush1.msra.mxu0 0.0
      %362 = vmatprep.subr.mxu0 0.0
      %363 = vmatpush1.msra.mxu0 0.0
      %364 = vmatprep.subr.mxu0 0.0
      %365 = vmatpush1.msra.mxu0 0.0
      %366 = vmatprep.subr.mxu0 0.0
      %367 = vmatpush1.msra.mxu0 %v321
      %368 = vmatprep.subr.mxu0 0.0
      %369 = vmatpush1.msra.mxu0 %v320
      %370 = vmatprep.subr.mxu0 0.0
      %371 = vmatpush1.msra.mxu0 %v319
      %372 = vmatprep.subr.mxu0 0.0
      %373 = vmatpush1.msra.mxu0 %v318
      %374 = vmatprep.subr.mxu0 0.0
      %375 = vmatpush2.msra.mxu0 0.0
      %376 = vmatprep.subr.mxu0 0.0
      %377 = vmatpush2.msra.mxu0 0.0
      %378 = vmatprep.subr.mxu0 0.0
      %379 = vmatpush2.msra.mxu0 0.0
      %380 = vmatprep.subr.mxu0 0.0
      %381 = vmatpush2.msra.mxu0 0.0
      %382 = vmatprep.subr.mxu0 0.0
      %383 = vmatpush2.msra.mxu0 0.0
      %384 = vmatprep.subr.mxu0 0.0
      %385 = vmatpush2.msra.mxu0 0.0
      %386 = vmatprep.subr.mxu0 0.0
      %387 = vmatpush2.msra.mxu0 0.0
      %388 = vmatprep.subr.mxu0 0.0
      %389 = vmatpush2.msra.mxu0 0.0
      %390 = vmatprep.subr.mxu0 0.0
      %391 = vmatpush2.msra.mxu0 0.0
      %392 = vmatprep.subr.mxu0 0.0
      %393 = vmatpush2.msra.mxu0 0.0
      %394 = vmatprep.subr.mxu0 0.0
      %395 = vmatpush2.msra.mxu0 0.0
      %396 = vmatprep.subr.mxu0 0.0
      %397 = vmatpush2.msra.mxu0 0.0
      %398 = vmatprep.subr.mxu0 0.0
      %399 = vmatpush2.msra.mxu0 0.0
      %400 = vmatprep.subr.mxu0 0.0
      %401 = vmatpush2.msra.mxu0 0.0
      %402 = vmatprep.subr.mxu0 0.0
      %403 = vmatpush2.msra.mxu0 0.0
      %404 = vmatprep.subr.mxu0 0.0
      %405 = vmatpush2.msra.mxu0 0.0
      %406 = vmatprep.mubr.f32.mxu0 0.0
      %407 = vmatmul.mubr.f32.gmra.mxu0 %v337
      %v408 = vpop.f32.mrf.mxu0
      %v409 = vadd.f32 %v329, %v408
      %v410 = vpop.f32.mrf.mxu0
      %411 = vmatprep.mubr.f32.mxu0 0.0
      %412 = vmatmul.mubr.f32.gmra.mxu0 %v340
      %v413 = vpop.f32.mrf.mxu0
      %v414 = vadd.f32 %v334, %v413
      %v415 = vpop.f32.mrf.mxu0
      %416 = vdwg.mxu0
      %v417 = vld [vmem:[%s2] sm:$0xff]
      %v418 = vld [vmem:[%s2 + $0x8] sm:$0xff]
      %420 = vset.pattern.permute.xlu0 0
      %421 = vperm.xlu0 %420, %v417
      %v422 = vpop.permute.xlu0 %421
      %425 = vset.pattern.permute.xlu0 0
      %426 = vperm.xlu0 %425, %v418
      %v427 = vpop.permute.xlu0 %426
      %v429 = vmul.f32 %v409, %v422
      %v430 = vmul.f32 %v414, %v427
      %v431 = vld [vmem:[%s11] sm:$0xff]
      %v432 = vld [vmem:[%s11 + $0x8] sm:$0xff]
      %v433 = vld [vmem:[%s11 + $0x10] sm:$0xff]
      %v434 = vld [vmem:[%s11 + $0x18] sm:$0xff]
      %v435 = vld [vmem:[%s12] sm:$0xff]
      %v436 = vld [vmem:[%s12 + $0x8] sm:$0xff]
      %v437 = vld [vmem:[%s12 + $0x10] sm:$0xff]
      %v438 = vld [vmem:[%s12 + $0x18] sm:$0xff]
      %440 = vset.pattern.permute.xlu0 0
      %441 = vperm.xlu0 %440, %v435
      %v442 = vpop.permute.xlu0 %441
      %445 = vset.pattern.permute.xlu0 0
      %446 = vperm.xlu0 %445, %v436
      %v447 = vpop.permute.xlu0 %446
      %450 = vset.pattern.permute.xlu0 0
      %451 = vperm.xlu0 %450, %v437
      %v452 = vpop.permute.xlu0 %451
      %455 = vset.pattern.permute.xlu0 0
      %456 = vperm.xlu0 %455, %v438
      %v457 = vpop.permute.xlu0 %456
      %vm459 = vcmask 130048
      %v461 = vsel %vm459, %v431, 0
      %v464 = vsel %vm459, %v432, 0
      %v467 = vsel %vm459, %v433, 0
      %v470 = vsel %vm459, %v434, 0
      %472 = vmatprep.subr.mxu0 0.0
      %473 = vmatpush1.msra.mxu0 0.0
      %474 = vmatprep.subr.mxu0 0.0
      %475 = vmatpush1.msra.mxu0 0.0
      %476 = vmatprep.subr.mxu0 0.0
      %477 = vmatpush1.msra.mxu0 0.0
      %478 = vmatprep.subr.mxu0 0.0
      %479 = vmatpush1.msra.mxu0 0.0
      %480 = vmatprep.subr.mxu0 0.0
      %481 = vmatpush1.msra.mxu0 0.0
      %482 = vmatprep.subr.mxu0 0.0
      %483 = vmatpush1.msra.mxu0 0.0
      %484 = vmatprep.subr.mxu0 0.0
      %485 = vmatpush1.msra.mxu0 0.0
      %486 = vmatprep.subr.mxu0 0.0
      %487 = vmatpush1.msra.mxu0 0.0
      %488 = vmatprep.subr.mxu0 0.0
      %489 = vmatpush1.msra.mxu0 0.0
      %490 = vmatprep.subr.mxu0 0.0
      %491 = vmatpush1.msra.mxu0 0.0
      %492 = vmatprep.subr.mxu0 0.0
      %493 = vmatpush1.msra.mxu0 0.0
      %494 = vmatprep.subr.mxu0 0.0
      %495 = vmatpush1.msra.mxu0 0.0
      %496 = vmatprep.subr.mxu0 0.0
      %497 = vmatpush1.msra.mxu0 0.0
      %498 = vmatprep.subr.mxu0 0.0
      %499 = vmatpush1.msra.mxu0 0.0
      %500 = vmatprep.subr.mxu0 0.0
      %501 = vmatpush1.msra.mxu0 %v430
      %502 = vmatprep.subr.mxu0 0.0
      %503 = vmatpush1.msra.mxu0 %v429
      %504 = vmatprep.subr.mxu0 0.0
      %505 = vmatpush2.msra.mxu0 0.0
      %506 = vmatprep.subr.mxu0 0.0
      %507 = vmatpush2.msra.mxu0 0.0
      %508 = vmatprep.subr.mxu0 0.0
      %509 = vmatpush2.msra.mxu0 0.0
      %510 = vmatprep.subr.mxu0 0.0
      %511 = vmatpush2.msra.mxu0 0.0
      %512 = vmatprep.subr.mxu0 0.0
      %513 = vmatpush2.msra.mxu0 0.0
      %514 = vmatprep.subr.mxu0 0.0
      %515 = vmatpush2.msra.mxu0 0.0
      %516 = vmatprep.subr.mxu0 0.0
      %517 = vmatpush2.msra.mxu0 0.0
      %518 = vmatprep.subr.mxu0 0.0
      %519 = vmatpush2.msra.mxu0 0.0
      %520 = vmatprep.subr.mxu0 0.0
      %521 = vmatpush2.msra.mxu0 0.0
      %522 = vmatprep.subr.mxu0 0.0
      %523 = vmatpush2.msra.mxu0 0.0
      %524 = vmatprep.subr.mxu0 0.0
      %525 = vmatpush2.msra.mxu0 0.0
      %526 = vmatprep.subr.mxu0 0.0
      %527 = vmatpush2.msra.mxu0 0.0
      %528 = vmatprep.subr.mxu0 0.0
      %529 = vmatpush2.msra.mxu0 0.0
      %530 = vmatprep.subr.mxu0 0.0
      %531 = vmatpush2.msra.mxu0 0.0
      %532 = vmatprep.subr.mxu0 0.0
      %533 = vmatpush2.msra.mxu0 0.0
      %534 = vmatprep.subr.mxu0 0.0
      %535 = vmatpush2.msra.mxu0 0.0
      %536 = vmatprep.mubr.f32.mxu0 0.0
      %537 = vmatmul.mubr.f32.gmra.mxu0 %v461
      %v538 = vpop.f32.mrf.mxu0
      %v539 = vadd.f32 %v442, %v538
      %v540 = vpop.f32.mrf.mxu0
      %541 = vmatprep.mubr.f32.mxu0 0.0
      %542 = vmatmul.mubr.f32.gmra.mxu0 %v464
      %v543 = vpop.f32.mrf.mxu0
      %v544 = vadd.f32 %v447, %v543
      %v545 = vpop.f32.mrf.mxu0
      %546 = vmatprep.mubr.f32.mxu0 0.0
      %547 = vmatmul.mubr.f32.gmra.mxu0 %v467
      %v548 = vpop.f32.mrf.mxu0
      %v549 = vadd.f32 %v452, %v548
      %v550 = vpop.f32.mrf.mxu0
      %551 = vmatprep.mubr.f32.mxu0 0.0
      %552 = vmatmul.mubr.f32.gmra.mxu0 %v470
      %v553 = vpop.f32.mrf.mxu0
      %v554 = vadd.f32 %v457, %v553
      %v555 = vpop.f32.mrf.mxu0
      %556 = vdwg.mxu0
      %vm557 = vcmask 15360
      %558 = vst.msk [vmem:[#allocation2] sm:$0xff] %vm557, %v539
      %559 = vst.msk [vmem:[#allocation2 + $0x8] sm:$0xff] %vm557, %v544
      %560 = vst.msk [vmem:[#allocation2 + $0x10] sm:$0xff] %vm557, %v549
      %561 = vst.msk [vmem:[#allocation2 + $0x18] sm:$0xff] %vm557, %v554
    $region73: #{progressive_weights_field_forward.1} parent=1 // pred_fallthru
      _
    %v562 = vld [vmem:[%s9] sm:$0xff]
    %v563 = vld [vmem:[%s9 + $0x8] sm:$0xff]
    %v564 = vld [vmem:[%s9 + $0x10] sm:$0xff]
    %v565 = vld [vmem:[%s9 + $0x18] sm:$0xff]
    %v566 = vld [vmem:[%s0] sm:$0x7]
    %v567 = vld [vmem:[%s10] sm:$0xff]
    %v568 = vld [vmem:[%s10 + $0x8] sm:$0xff]
    %v569 = vld [vmem:[%s10 + $0x10] sm:$0xff]
    %v570 = vld [vmem:[%s10 + $0x18] sm:$0xff]
    %572 = vset.pattern.permute.xlu0 0
    %573 = vperm.xlu0 %572, %v567
    %v574 = vpop.permute.xlu0 %573
    %577 = vset.pattern.permute.xlu0 0
    %578 = vperm.xlu0 %577, %v568
    %v579 = vpop.permute.xlu0 %578
    %582 = vset.pattern.permute.xlu0 0
    %583 = vperm.xlu0 %582, %v569
    %v584 = vpop.permute.xlu0 %583
    %587 = vset.pattern.permute.xlu0 0
    %588 = vperm.xlu0 %587, %v570
    %v589 = vpop.permute.xlu0 %588
    %vm591 = vcmask 23552
    %v593 = vsel %vm591, %v562, 0
    %v596 = vsel %vm591, %v563, 0
    %v599 = vsel %vm591, %v564, 0
    %v602 = vsel %vm591, %v565, 0
    %vm604 = vcmask 1042432
    %v606 = vsel %vm604, %v566, 0
    %608 = vmatprep.subr.mxu0 0.0
    %609 = vmatpush1.msra.mxu0 0.0
    %610 = vmatprep.subr.mxu0 0.0
    %611 = vmatpush1.msra.mxu0 0.0
    %612 = vmatprep.subr.mxu0 0.0
    %613 = vmatpush1.msra.mxu0 0.0
    %614 = vmatprep.subr.mxu0 0.0
    %615 = vmatpush1.msra.mxu0 0.0
    %616 = vmatprep.subr.mxu0 0.0
    %617 = vmatpush1.msra.mxu0 0.0
    %618 = vmatprep.subr.mxu0 0.0
    %619 = vmatpush1.msra.mxu0 0.0
    %620 = vmatprep.subr.mxu0 0.0
    %621 = vmatpush1.msra.mxu0 0.0
    %622 = vmatprep.subr.mxu0 0.0
    %623 = vmatpush1.msra.mxu0 0.0
    %624 = vmatprep.subr.mxu0 0.0
    %625 = vmatpush1.msra.mxu0 0.0
    %626 = vmatprep.subr.mxu0 0.0
    %627 = vmatpush1.msra.mxu0 0.0
    %628 = vmatprep.subr.mxu0 0.0
    %629 = vmatpush1.msra.mxu0 0.0
    %630 = vmatprep.subr.mxu0 0.0
    %631 = vmatpush1.msra.mxu0 0.0
    %632 = vmatprep.subr.mxu0 0.0
    %633 = vmatpush1.msra.mxu0 0.0
    %634 = vmatprep.subr.mxu0 0.0
    %635 = vmatpush1.msra.mxu0 0.0
    %636 = vmatprep.subr.mxu0 0.0
    %637 = vmatpush1.msra.mxu0 0.0
    %638 = vmatprep.subr.mxu0 0.0
    %639 = vmatpush1.msra.mxu0 %v606
    %640 = vmatprep.subr.mxu0 0.0
    %641 = vmatpush2.msra.mxu0 0.0
    %642 = vmatprep.subr.mxu0 0.0
    %643 = vmatpush2.msra.mxu0 0.0
    %644 = vmatprep.subr.mxu0 0.0
    %645 = vmatpush2.msra.mxu0 0.0
    %646 = vmatprep.subr.mxu0 0.0
    %647 = vmatpush2.msra.mxu0 0.0
    %648 = vmatprep.subr.mxu0 0.0
    %649 = vmatpush2.msra.mxu0 0.0
    %650 = vmatprep.subr.mxu0 0.0
    %651 = vmatpush2.msra.mxu0 0.0
    %652 = vmatprep.subr.mxu0 0.0
    %653 = vmatpush2.msra.mxu0 0.0
    %654 = vmatprep.subr.mxu0 0.0
    %655 = vmatpush2.msra.mxu0 0.0
    %656 = vmatprep.subr.mxu0 0.0
    %657 = vmatpush2.msra.mxu0 0.0
    %658 = vmatprep.subr.mxu0 0.0
    %659 = vmatpush2.msra.mxu0 0.0
    %660 = vmatprep.subr.mxu0 0.0
    %661 = vmatpush2.msra.mxu0 0.0
    %662 = vmatprep.subr.mxu0 0.0
    %663 = vmatpush2.msra.mxu0 0.0
    %664 = vmatprep.subr.mxu0 0.0
    %665 = vmatpush2.msra.mxu0 0.0
    %666 = vmatprep.subr.mxu0 0.0
    %667 = vmatpush2.msra.mxu0 0.0
    %668 = vmatprep.subr.mxu0 0.0
    %669 = vmatpush2.msra.mxu0 0.0
    %670 = vmatprep.subr.mxu0 0.0
    %671 = vmatpush2.msra.mxu0 0.0
    %672 = vmatprep.mubr.f32.mxu0 0.0
    %673 = vmatmul.mubr.f32.gmra.mxu0 %v593
    %v674 = vpop.f32.mrf.mxu0
    %v675 = vadd.f32 %v574, %v674
    %v676 = vpop.f32.mrf.mxu0
    %677 = vmatprep.mubr.f32.mxu0 0.0
    %678 = vmatmul.mubr.f32.gmra.mxu0 %v596
    %v679 = vpop.f32.mrf.mxu0
    %v680 = vadd.f32 %v579, %v679
    %v681 = vpop.f32.mrf.mxu0
    %682 = vmatprep.mubr.f32.mxu0 0.0
    %683 = vmatmul.mubr.f32.gmra.mxu0 %v599
    %v684 = vpop.f32.mrf.mxu0
    %v685 = vadd.f32 %v584, %v684
    %v686 = vpop.f32.mrf.mxu0
    %687 = vmatprep.mubr.f32.mxu0 0.0
    %688 = vmatmul.mubr.f32.gmra.mxu0 %v602
    %v689 = vpop.f32.mrf.mxu0
    %v690 = vadd.f32 %v589, %v689
    %v691 = vpop.f32.mrf.mxu0
    %692 = vdwg.mxu0
    %v693 = vld [vmem:[#allocation2] sm:$0xff]
    %v694 = vld [vmem:[#allocation2 + $0x8] sm:$0xff]
    %v695 = vld [vmem:[#allocation2 + $0x10] sm:$0xff]
    %v696 = vld [vmem:[#allocation2 + $0x18] sm:$0xff]
    %698 = vset.pattern.permute.xlu0 0
    %699 = vperm.xlu0 %698, %v693
    %v700 = vpop.permute.xlu0 %699
    %703 = vset.pattern.permute.xlu0 0
    %704 = vperm.xlu0 %703, %v694
    %v705 = vpop.permute.xlu0 %704
    %708 = vset.pattern.permute.xlu0 0
    %709 = vperm.xlu0 %708, %v695
    %v710 = vpop.permute.xlu0 %709
    %713 = vset.pattern.permute.xlu0 0
    %714 = vperm.xlu0 %713, %v696
    %v715 = vpop.permute.xlu0 %714
    %v717 = vadd.f32 %v675, %v700
    %v718 = vadd.f32 %v680, %v705
    %v719 = vadd.f32 %v685, %v710
    %v720 = vadd.f32 %v690, %v715
    %721 = vset.pattern.permute.xlu0 1
    %722 = vperm.xlu0 %721, %v693
    %v723 = vpop.permute.xlu0 %722
    %725 = vset.pattern.permute.xlu0 1
    %726 = vperm.xlu0 %725, %v694
    %v727 = vpop.permute.xlu0 %726
    %729 = vset.pattern.permute.xlu0 1
    %730 = vperm.xlu0 %729, %v695
    %v731 = vpop.permute.xlu0 %730
    %733 = vset.pattern.permute.xlu0 1
    %734 = vperm.xlu0 %733, %v696
    %v735 = vpop.permute.xlu0 %734
    %v737 = vadd.f32 %v675, %v723
    %v738 = vadd.f32 %v680, %v727
    %v739 = vadd.f32 %v685, %v731
    %v740 = vadd.f32 %v690, %v735
    %745 = vrot.lane.b32.xlu0 %v737, 16
    %v746 = vpop.permute.xlu0 %745
    %747 = vrot.lane.b32.xlu0 %v738, 16
    %v748 = vpop.permute.xlu0 %747
    %749 = vrot.lane.b32.xlu0 %v739, 16
    %v750 = vpop.permute.xlu0 %749
    %751 = vrot.lane.b32.xlu0 %v740, 16
    %v752 = vpop.permute.xlu0 %751
    %vm757 = vcmask 130048
    %v758 = vsel %vm757, %v717, %v746
    %v759 = vsel %vm757, %v718, %v748
    %v760 = vsel %vm757, %v719, %v750
    %v761 = vsel %vm757, %v720, %v752
    %v762 = vmax.f32 %v758, 0.0
    %v763 = vmax.f32 %v759, 0.0
    %v764 = vmax.f32 %v760, 0.0
    %v765 = vmax.f32 %v761, 0.0
    %v766 = vld [vmem:[%s13] sm:$0xff]
    %v767 = vld [vmem:[%s13 + $0x8] sm:$0xff]
    %v768 = vld [vmem:[%s13 + $0x10] sm:$0xff]
    %v769 = vld [vmem:[%s13 + $0x18] sm:$0xff]
    %v770 = vld [vmem:[%s14] sm:$0xff]
    %v771 = vld [vmem:[%s14 + $0x8] sm:$0xff]
    %v772 = vld [vmem:[%s14 + $0x10] sm:$0xff]
    %v773 = vld [vmem:[%s14 + $0x18] sm:$0xff]
    %775 = vset.pattern.permute.xlu0 0
    %776 = vperm.xlu0 %775, %v770
    %v777 = vpop.permute.xlu0 %776
    %780 = vset.pattern.permute.xlu0 0
    %781 = vperm.xlu0 %780, %v771
    %v782 = vpop.permute.xlu0 %781
    %785 = vset.pattern.permute.xlu0 0
    %786 = vperm.xlu0 %785, %v772
    %v787 = vpop.permute.xlu0 %786
    %790 = vset.pattern.permute.xlu0 0
    %791 = vperm.xlu0 %790, %v773
    %v792 = vpop.permute.xlu0 %791
    %vm794 = vcmask 261120
    %v796 = vsel %vm794, %v766, 0
    %v799 = vsel %vm794, %v767, 0
    %v802 = vsel %vm794, %v768, 0
    %v805 = vsel %vm794, %v769, 0
    %807 = vmatprep.subr.mxu0 0.0
    %808 = vmatpush1.msra.mxu0 0.0
    %809 = vmatprep.subr.mxu0 0.0
    %810 = vmatpush1.msra.mxu0 0.0
    %811 = vmatprep.subr.mxu0 0.0
    %812 = vmatpush1.msra.mxu0 0.0
    %813 = vmatprep.subr.mxu0 0.0
    %814 = vmatpush1.msra.mxu0 0.0
    %815 = vmatprep.subr.mxu0 0.0
    %816 = vmatpush1.msra.mxu0 0.0
    %817 = vmatprep.subr.mxu0 0.0
    %818 = vmatpush1.msra.mxu0 0.0
    %819 = vmatprep.subr.mxu0 0.0
    %820 = vmatpush1.msra.mxu0 0.0
    %821 = vmatprep.subr.mxu0 0.0
    %822 = vmatpush1.msra.mxu0 0.0
    %823 = vmatprep.subr.mxu0 0.0
    %824 = vmatpush1.msra.mxu0 0.0
    %825 = vmatprep.subr.mxu0 0.0
    %826 = vmatpush1.msra.mxu0 0.0
    %827 = vmatprep.subr.mxu0 0.0
    %828 = vmatpush1.msra.mxu0 0.0
    %829 = vmatprep.subr.mxu0 0.0
    %830 = vmatpush1.msra.mxu0 0.0
    %831 = vmatprep.subr.mxu0 0.0
    %832 = vmatpush1.msra.mxu0 %v765
    %833 = vmatprep.subr.mxu0 0.0
    %834 = vmatpush1.msra.mxu0 %v764
    %835 = vmatprep.subr.mxu0 0.0
    %836 = vmatpush1.msra.mxu0 %v763
    %837 = vmatprep.subr.mxu0 0.0
    %838 = vmatpush1.msra.mxu0 %v762
    %839 = vmatprep.subr.mxu0 0.0
    %840 = vmatpush2.msra.mxu0 0.0
    %841 = vmatprep.subr.mxu0 0.0
    %842 = vmatpush2.msra.mxu0 0.0
    %843 = vmatprep.subr.mxu0 0.0
    %844 = vmatpush2.msra.mxu0 0.0
    %845 = vmatprep.subr.mxu0 0.0
    %846 = vmatpush2.msra.mxu0 0.0
    %847 = vmatprep.subr.mxu0 0.0
    %848 = vmatpush2.msra.mxu0 0.0
    %849 = vmatprep.subr.mxu0 0.0
    %850 = vmatpush2.msra.mxu0 0.0
    %851 = vmatprep.subr.mxu0 0.0
    %852 = vmatpush2.msra.mxu0 0.0
    %853 = vmatprep.subr.mxu0 0.0
    %854 = vmatpush2.msra.mxu0 0.0
    %855 = vmatprep.subr.mxu0 0.0
    %856 = vmatpush2.msra.mxu0 0.0
    %857 = vmatprep.subr.mxu0 0.0
    %858 = vmatpush2.msra.mxu0 0.0
    %859 = vmatprep.subr.mxu0 0.0
    %860 = vmatpush2.msra.mxu0 0.0
    %861 = vmatprep.subr.mxu0 0.0
    %862 = vmatpush2.msra.mxu0 0.0
    %863 = vmatprep.subr.mxu0 0.0
    %864 = vmatpush2.msra.mxu0 0.0
    %865 = vmatprep.subr.mxu0 0.0
    %866 = vmatpush2.msra.mxu0 0.0
    %867 = vmatprep.subr.mxu0 0.0
    %868 = vmatpush2.msra.mxu0 0.0
    %869 = vmatprep.subr.mxu0 0.0
    %870 = vmatpush2.msra.mxu0 0.0
    %871 = vmatprep.mubr.f32.mxu0 0.0
    %872 = vmatmul.mubr.f32.gmra.mxu0 %v796
    %v873 = vpop.f32.mrf.mxu0
    %v874 = vadd.f32 %v777, %v873
    %v875 = vpop.f32.mrf.mxu0
    %876 = vmatprep.mubr.f32.mxu0 0.0
    %877 = vmatmul.mubr.f32.gmra.mxu0 %v799
    %v878 = vpop.f32.mrf.mxu0
    %v879 = vadd.f32 %v782, %v878
    %v880 = vpop.f32.mrf.mxu0
    %881 = vmatprep.mubr.f32.mxu0 0.0
    %882 = vmatmul.mubr.f32.gmra.mxu0 %v802
    %v883 = vpop.f32.mrf.mxu0
    %v884 = vadd.f32 %v787, %v883
    %v885 = vpop.f32.mrf.mxu0
    %886 = vmatprep.mubr.f32.mxu0 0.0
    %887 = vmatmul.mubr.f32.gmra.mxu0 %v805
    %v888 = vpop.f32.mrf.mxu0
    %v889 = vadd.f32 %v792, %v888
    %v890 = vpop.f32.mrf.mxu0
    %891 = vdwg.mxu0
    %v892 = vmax.f32 %v874, 0.0
    %v893 = vmax.f32 %v879, 0.0
    %v894 = vmax.f32 %v884, 0.0
    %v895 = vmax.f32 %v889, 0.0
    %v896 = vld [vmem:[%s15] sm:$0xf]
    %v897 = vld [vmem:[%s16] sm:$0xf]
    %899 = vset.pattern.permute.xlu0 0
    %900 = vperm.xlu0 %899, %v897
    %v901 = vpop.permute.xlu0 %900
    %v904 = vsel %vm794, %v896, 0
    %906 = vmatprep.subr.mxu0 0.0
    %907 = vmatpush1.msra.mxu0 0.0
    %908 = vmatprep.subr.mxu0 0.0
    %909 = vmatpush1.msra.mxu0 0.0
    %910 = vmatprep.subr.mxu0 0.0
    %911 = vmatpush1.msra.mxu0 0.0
    %912 = vmatprep.subr.mxu0 0.0
    %913 = vmatpush1.msra.mxu0 0.0
    %914 = vmatprep.subr.mxu0 0.0
    %915 = vmatpush1.msra.mxu0 0.0
    %916 = vmatprep.subr.mxu0 0.0
    %917 = vmatpush1.msra.mxu0 0.0
    %918 = vmatprep.subr.mxu0 0.0
    %919 = vmatpush1.msra.mxu0 0.0
    %920 = vmatprep.subr.mxu0 0.0
    %921 = vmatpush1.msra.mxu0 0.0
    %922 = vmatprep.subr.mxu0 0.0
    %923 = vmatpush1.msra.mxu0 0.0
    %924 = vmatprep.subr.mxu0 0.0
    %925 = vmatpush1.msra.mxu0 0.0
    %926 = vmatprep.subr.mxu0 0.0
    %927 = vmatpush1.msra.mxu0 0.0
    %928 = vmatprep.subr.mxu0 0.0
    %929 = vmatpush1.msra.mxu0 0.0
    %930 = vmatprep.subr.mxu0 0.0
    %931 = vmatpush1.msra.mxu0 %v895
    %932 = vmatprep.subr.mxu0 0.0
    %933 = vmatpush1.msra.mxu0 %v894
    %934 = vmatprep.subr.mxu0 0.0
    %935 = vmatpush1.msra.mxu0 %v893
    %936 = vmatprep.subr.mxu0 0.0
    %937 = vmatpush1.msra.mxu0 %v892
    %938 = vmatprep.subr.mxu0 0.0
    %939 = vmatpush2.msra.mxu0 0.0
    %940 = vmatprep.subr.mxu0 0.0
    %941 = vmatpush2.msra.mxu0 0.0
    %942 = vmatprep.subr.mxu0 0.0
    %943 = vmatpush2.msra.mxu0 0.0
    %944 = vmatprep.subr.mxu0 0.0
    %945 = vmatpush2.msra.mxu0 0.0
    %946 = vmatprep.subr.mxu0 0.0
    %947 = vmatpush2.msra.mxu0 0.0
    %948 = vmatprep.subr.mxu0 0.0
    %949 = vmatpush2.msra.mxu0 0.0
    %950 = vmatprep.subr.mxu0 0.0
    %951 = vmatpush2.msra.mxu0 0.0
    %952 = vmatprep.subr.mxu0 0.0
    %953 = vmatpush2.msra.mxu0 0.0
    %954 = vmatprep.subr.mxu0 0.0
    %955 = vmatpush2.msra.mxu0 0.0
    %956 = vmatprep.subr.mxu0 0.0
    %957 = vmatpush2.msra.mxu0 0.0
    %958 = vmatprep.subr.mxu0 0.0
    %959 = vmatpush2.msra.mxu0 0.0
    %960 = vmatprep.subr.mxu0 0.0
    %961 = vmatpush2.msra.mxu0 0.0
    %962 = vmatprep.subr.mxu0 0.0
    %963 = vmatpush2.msra.mxu0 0.0
    %964 = vmatprep.subr.mxu0 0.0
    %965 = vmatpush2.msra.mxu0 0.0
    %966 = vmatprep.subr.mxu0 0.0
    %967 = vmatpush2.msra.mxu0 0.0
    %968 = vmatprep.subr.mxu0 0.0
    %969 = vmatpush2.msra.mxu0 0.0
    %970 = vmatprep.mubr.f32.mxu0 0.0
    %971 = vmatmul.mubr.f32.gmra.mxu0 %v904
    %v972 = vpop.f32.mrf.mxu0
    %v973 = vadd.f32 %v901, %v972
    %v974 = vpop.f32.mrf.mxu0
    %975 = vdwg.mxu0
    %vm976 = vcmask 125952
    %977 = vst.msk [vmem:[#allocation3] sm:$0xf] %vm976, %v973
    %979 = vrot.lane.b32.xlu0 %v973, 112
    %v980 = vpop.permute.xlu0 %979
    %s982 = scalar_lea.vmem [#allocation3], 4
    %983 = vst.msk [vmem:[%s982] sm:$0xf] %vm976, %v980
    // Predicated region
    $region74: #{progressive_weights_field_forward.1} parent=1 // pred_check
      _
    $region75: #{progressive_weights_field_forward.1} parent=1 // pred_check_branch
      %985 = sbr.rel (0) target = $region77
    $region76: #{progressive_weights_field_forward.1} parent=1 // pred_region
      %s987 = ssub.s32 128, 128
      %988 = vsyncadd [#allocation4], %s987
      %s989 = sshll.u32 [#allocation3], 4
      %s990 = int_to_ptr.vmem [resolvable:$true] %s989
      %995 = dma.vmem_to_hbm [thread:$0]  %s990, 128, %s17, [#allocation4], 64, 64, 4
    $region77: #{progressive_weights_field_forward.1} parent=1 // pred_fallthru
      _
    // Predicated region
    $region78: #{progressive_weights_field_forward.1} parent=1 // pred_check
      _
    $region79: #{progressive_weights_field_forward.1} parent=1 // pred_check_branch
      %997 = sbr.rel (0) target = $region81
    $region80: #{progressive_weights_field_forward.1} parent=1 // pred_region
      %998 = dma.done [#allocation4], 128
    $region81: #{progressive_weights_field_forward.1} parent=1 // pred_fallthru
      _
    %999 = vsyncpa [#allocation4], 1

</llo_original>
